<compile_context>
chip_gen: v7x
topology: tpu7x:2x2x1
jax: 0.10.0
libtpu: 0.0.40
codegen_flags: <defaults>
</compile_context>

<pallas_src>
import jax
import jax.numpy as jnp
from jax.experimental import pallas as pl
from jax.experimental.pallas import tpu as pltpu

EPS = 1e-5
SCALE = 10.0


def _round_up(x, m):
    return ((x + m - 1) // m) * m


def _dist_linear_kernel(x_ref, w_ref, o_ref):
    # x_ref: (tm, K) input rows; w_ref: (tn, K) weight rows; o_ref: (tm, tn).
    x = x_ref[...]                                             # f32 (tm, K)
    w = w_ref[...]                                             # f32 (tn, K)

    # Row-wise L2 norms. PyTorch adds eps to the *norm* (not norm^2), so we
    # compute sqrt then one reciprocal per row and broadcast-multiply.
    x_norm = jnp.sqrt(jnp.sum(x * x, axis=1, keepdims=True))   # (tm, 1)
    w_norm = jnp.sqrt(jnp.sum(w * w, axis=1, keepdims=True))   # (tn, 1)
    xn = x * (1.0 / (x_norm + EPS))
    wn = w * (1.0 / (w_norm + EPS))

    # Cosine similarities on the MXU: contract the feature axis of both sides
    # (equivalent to xn @ wn.T) with an f32 accumulator.
    cos = jax.lax.dot_general(
        xn, wn,
        dimension_numbers=(((1,), (1,)), ((), ())),
        preferred_element_type=jnp.float32,
    )
    o_ref[...] = (SCALE * cos).astype(o_ref.dtype)


def dist_linear(x, weight, *, tm=None, tn=128):
    """x: (N, indim) f32; weight: (outdim, indim) f32. Returns (N, outdim)."""
    N, K = x.shape
    M, K2 = weight.shape
    assert K == K2, "feature dims must match"

    # Pick a sublane-aligned batch tile; keep output tile lane-dense (x128).
    if tm is None:
        tm = min(128, _round_up(N, 8))
    tm = max(8, (tm // 8) * 8)
    tn = max(128, (tn // 128) * 128)

    # Pad batch / outdim to tile multiples (zero rows normalize to zero rows,
    # so results are unchanged), then slice back at the end.
    Np = _round_up(N, tm)
    Mp = _round_up(M, tn)
    xp = x if Np == N else jnp.pad(x, ((0, Np - N), (0, 0)))
    wp = weight if Mp == M else jnp.pad(weight, ((0, Mp - M), (0, 0)))

    grid = (Np // tm, Mp // tn)
    out = pl.pallas_call(
        _dist_linear_kernel,
        out_shape=jax.ShapeDtypeStruct((Np, Mp), x.dtype),
        grid_spec=pltpu.PrefetchScalarGridSpec(
            num_scalar_prefetch=0,
            grid=grid,
            in_specs=[
                # x rows for this batch tile, full feature axis in-block.
                pl.BlockSpec((tm, K), lambda i, j: (i, 0)),
                # weight rows for this output tile, full feature axis in-block.
                pl.BlockSpec((tn, K), lambda i, j: (j, 0)),
            ],
            out_specs=pl.BlockSpec((tm, tn), lambda i, j: (i, j)),
        ),
        compiler_params=pltpu.CompilerParams(
            dimension_semantics=("parallel", "parallel"),
        ),
    )(xp, wp)

    if (Np, Mp) != (N, M):
        out = out[:N, :M]
    return out


if __name__ == "__main__":
    # Module: distLinear(indim=128, outdim=200); batch N=16.
    # outdim deliberately not a multiple of 128 to exercise the padding path.
    N, indim, outdim = 16, 128, 200

    key = jax.random.PRNGKey(0)
    kx, kw = jax.random.split(key, 2)
    x = jax.random.normal(kx, (N, indim), dtype=jnp.float32)
    weight = jax.random.normal(kw, (outdim, indim), dtype=jnp.float32)

    out = dist_linear(x, weight)
    out = jax.block_until_ready(out)

    # Pure-JAX reference of the PyTorch forward.
    x_norm = jnp.sqrt(jnp.sum(x * x, axis=1, keepdims=True))
    xn = x / (x_norm + EPS)
    w_norm = jnp.sqrt(jnp.sum(weight * weight, axis=1, keepdims=True))
    wn = weight / (w_norm + EPS)
    ref = SCALE * jnp.dot(xn, wn.T, precision=jax.lax.Precision.HIGHEST)

    assert out.shape == (N, outdim)
    assert jnp.allclose(out, ref, atol=1e-3, rtol=1e-3), (
        float(jnp.max(jnp.abs(out - ref))))

    print("KERNEL_OK")
</pallas_src>

<mosaic_0001>
module attributes {stable_mosaic.version = 11 : i64} {
  func.func @_dist_linear_kernel(%arg0: i32, %arg1: i32, %arg2: memref<16x128xf32, #tpu.memory_space<vmem>>, %arg3: memref<128x128xf32, #tpu.memory_space<vmem>>, %arg4: memref<16x128xf32, #tpu.memory_space<vmem>>) attributes {dimension_semantics = [#tpu.dimension_semantics<parallel>, #tpu.dimension_semantics<parallel>], iteration_bounds = array<i64: 1, 2>, scalar_prefetch = 0 : i64, scratch_operands = 0 : i64, tpu.core_type = #tpu.core_type<tc>, window_params = [{transform_indices = @transform_0, window_bounds = array<i64: 16, 128>}, {transform_indices = @transform_1, window_bounds = array<i64: 128, 128>}, {transform_indices = @transform_2, window_bounds = array<i64: 16, 128>}]} {
    %c0 = arith.constant 0 : index
    %c0_0 = arith.constant 0 : index
    %0 = vector.load %arg2[%c0, %c0_0] : memref<16x128xf32, #tpu.memory_space<vmem>>, vector<16x128xf32>
    %c0_1 = arith.constant 0 : index
    %c0_2 = arith.constant 0 : index
    %1 = vector.load %arg3[%c0_1, %c0_2] : memref<128x128xf32, #tpu.memory_space<vmem>>, vector<128x128xf32>
    %2 = arith.mulf %0, %0 : vector<16x128xf32>
    %cst = arith.constant dense<0.000000e+00> : vector<16xf32>
    %3 = vector.multi_reduction <add>, %2, %cst [1] : vector<16x128xf32> to vector<16xf32>
    %4 = vector.shape_cast %3 : vector<16xf32> to vector<16x1xf32>
    %5 = math.sqrt %4 : vector<16x1xf32>
    %6 = arith.mulf %1, %1 : vector<128x128xf32>
    %cst_3 = arith.constant dense<0.000000e+00> : vector<128xf32>
    %7 = vector.multi_reduction <add>, %6, %cst_3 [1] : vector<128x128xf32> to vector<128xf32>
    %8 = vector.shape_cast %7 : vector<128xf32> to vector<128x1xf32>
    %9 = math.sqrt %8 : vector<128x1xf32>
    %cst_4 = arith.constant 9.99999974E-6 : f32
    %10 = vector.broadcast %cst_4 : f32 to vector<16x1xf32>
    %11 = arith.addf %5, %10 : vector<16x1xf32>
    %cst_5 = arith.constant 1.000000e+00 : f32
    %12 = vector.broadcast %cst_5 : f32 to vector<16x1xf32>
    %13 = arith.divf %12, %11 : vector<16x1xf32>
    %14 = vector.broadcast %13 : vector<16x1xf32> to vector<16x128xf32>
    %15 = arith.mulf %0, %14 : vector<16x128xf32>
    %cst_6 = arith.constant 9.99999974E-6 : f32
    %16 = vector.broadcast %cst_6 : f32 to vector<128x1xf32>
    %17 = arith.addf %9, %16 : vector<128x1xf32>
    %cst_7 = arith.constant 1.000000e+00 : f32
    %18 = vector.broadcast %cst_7 : f32 to vector<128x1xf32>
    %19 = arith.divf %18, %17 : vector<128x1xf32>
    %20 = vector.broadcast %19 : vector<128x1xf32> to vector<128x128xf32>
    %21 = arith.mulf %1, %20 : vector<128x128xf32>
    %cst_8 = arith.constant dense<0.000000e+00> : vector<16x128xf32>
    %22 = tpu.matmul %15, %21, %cst_8 {dimension_numbers = #tpu.dot_dimension_numbers<[1], [1], [0], [0], [0, 0, 1, 0], [], []>} : vector<16x128xf32>, vector<128x128xf32>, vector<16x128xf32> -> vector<16x128xf32>
    %cst_9 = arith.constant 1.000000e+01 : f32
    %23 = vector.broadcast %cst_9 : f32 to vector<16x128xf32>
    %24 = arith.mulf %23, %22 : vector<16x128xf32>
    %c0_10 = arith.constant 0 : index
    %c0_11 = arith.constant 0 : index
    %25 = vector.load %arg4[%c0_10, %c0_11] : memref<16x128xf32, #tpu.memory_space<vmem>>, vector<16x128xf32>
    tpu.vector_store %arg4[%c0_10, %c0_11], %24 {strides = array<i32>} : memref<16x128xf32, #tpu.memory_space<vmem>>, vector<16x128xf32>,
    return
  }
  func.func @transform_0(%arg0: i32, %arg1: i32) -> (i32, i32) {
    %c0_i32 = arith.constant 0 : i32
    %c0_i32_0 = arith.constant 0 : i32
    return %arg0, %c0_i32 : i32, i32
  }
  func.func @transform_1(%arg0: i32, %arg1: i32) -> (i32, i32) {
    %c0_i32 = arith.constant 0 : i32
    %c0_i32_0 = arith.constant 0 : i32
    return %arg1, %c0_i32 : i32, i32
  }
  func.func @transform_2(%arg0: i32, %arg1: i32) -> (i32, i32) {
    %c0_i32 = arith.constant 0 : i32
    return %arg0, %arg1 : i32, i32
  }
}

</mosaic_0001>

<llo_original>
// kernel: tpu_custom_call.1
$region0: #{tpu_custom_call.1}
  #allocation0 [shape = 'u32[]', space=smem, size = 0x4, offset = 0x4, fixed_abs, tag = 'smem constant byte address 0x4 - core index']
  #allocation1 [shape = 'u32[144,128]{1,0:T(1,128)}', space=vmem, size = 0x12000, scoped, tag = 'internal scratch']
  %s0 = inlined_call_operand.hbm [shape: f32[16,128], index: 0, kind: input, shape index: {}]
  %s1 = inlined_call_operand.hbm [shape: f32[256,128], index: 1, kind: input, shape index: {}]
  %s2 = inlined_call_operand.hbm [shape: f32[16,256], index: 2, kind: output, shape index: {}]
  %s3 = sld [smem:[#allocation0]]
  $region49: #{tpu_custom_call.1} parent=0
    _
  %s5 = ssub.s32 1, %s3
  %s6 = scalar_select 0, %s5, %s3
  $region1: #{tpu_custom_call.1} parent=0
    #allocation2 [shape = 'u8[8192]{0}', space=vmem, size = 0x2000, scoped, tag = 'input window, operand 0, single buffered']
    #allocation3 [shape = 's32[2]{0}', space=sflag, size = 0x8, scoped, tag = 'scoped memory for tpu_custom_call.1']
    #allocation4 [shape = 's32[2]{0}', space=sflag, size = 0x8, scoped, tag = 'scoped memory for tpu_custom_call.1']
    #allocation5 [shape = 'u8[131072]{0}', space=vmem, size = 0x20000, scoped, tag = 'input window, operand 1']
    #allocation6 [shape = 's32[2]{0}', space=sflag, size = 0x8, scoped, tag = 'scoped memory for tpu_custom_call.1']
    #allocation7 [shape = 'u8[16384]{0}', space=vmem, size = 0x4000, scoped, tag = 'output window, operand 0']
    %7 = vsyncpa [#allocation3], 0
    %8 = vsyncpa [#allocation6], 0
    %s9 = scalar_lea.sflag [#allocation6], 1
    %10 = vsyncpa %s9, 0
    %11 = vsyncpa [#allocation4], 0
    %s12 = scalar_lea.sflag [#allocation4], 1
    %13 = vsyncpa %s12, 0
    loop: start=0, step=1, limit=4
    $region2: #{tpu_custom_call.1} parent=1 // loop_pre_header
      _
    $region3: #{tpu_custom_call.1} parent=1 // loop_header
      %s15 = sphi 0, %s19
      %p16 = scmp.ge.s32.totalorder %s15, 4
      %s22 = sphi 0, %s34
      %s23 = sphi 0, %s30
      %s24 = sphi 0, %s22
      %s25 = sphi 0, %s23
      %s26 = sphi 0, %s24
      %s27 = sphi 0, %s25
      %s37 = sphi 0, %s39
      %s40 = sphi 0, %s37
      %s41 = sphi 0, %s40
      %s57 = sphi 0, %s41
      %s63 = sphi 0, %s65
      %s66 = sphi 0, %s63
      %s67 = sphi 0, %s66
      %s83 = sphi 0, %s67
      %s91 = sphi 0, %s93
      %s94 = sphi 0, %s91
      %s95 = sphi 0, %s94
      %s111 = sphi 0, %s95
    $region4: #{tpu_custom_call.1} parent=1 // loop_header_branch
      %18 = sbr.rel (%p16) target = $region8
    $region5: #{tpu_custom_call.1} parent=1 // loop_body
      %s20 = ssub.s32 %s15, 1
      %s21 = ssub.s32 %s15, 2
      %s28 = sadd.s32 1, %s23
      %p29 = scmp.ge.s32.totalorder %s28, 2
      %s30 = scalar_select %p29, 0, %s28
      %s31 = sadd.s32 1, %s22
      %s32 = scalar_select %p29, %s31, %s22
      %p33 = scmp.ge.s32.totalorder %s32, 1
      %s34 = scalar_select %p33, 0, %s32
      %s35 = ssub.s32 %s22, %s34
      %p36 = scmp.eq.s32.totalorder %s35, 0
      %s38 = sadd.s32 %s37, 1
      %s39 = scalar_select %p36, %s37, %s38
      %p42 = pneg %p36
      %p43 = scmp.eq.s32.totalorder %s15, 1
      %p44 = por %p42, %p43
      %p45 = scmp.ne.s32.totalorder %s37, %s40
      %p46 = scmp.eq.s32.totalorder %s15, 0
      %p47 = por %p45, %p46
      %p48 = scmp.ne.s32.totalorder %s37, %s40
      %p49 = scmp.eq.s32.totalorder %s20, 1
      %p50 = por %p48, %p49
      %p51 = scmp.ne.s32.totalorder %s40, %s41
      %p52 = scmp.eq.s32.totalorder %s20, 0
      %p53 = por %p51, %p52
      %p54 = scmp.ne.s32.totalorder %s40, %s41
      %p55 = scmp.eq.s32.totalorder %s21, 1
      %p56 = por %p54, %p55
      %p58 = scmp.ne.s32.totalorder %s41, %s57
      %p59 = scmp.eq.s32.totalorder %s21, 0
      %p60 = por %p58, %p59
      %s61 = ssub.s32 %s23, %s30
      %p62 = scmp.eq.s32.totalorder %s61, 0
      %s64 = sadd.s32 %s63, 1
      %s65 = scalar_select %p62, %s63, %s64
      %p68 = pneg %p62
      %p69 = scmp.eq.s32.totalorder %s15, 1
      %p70 = por %p68, %p69
      %p71 = scmp.ne.s32.totalorder %s63, %s66
      %p72 = scmp.eq.s32.totalorder %s15, 0
      %p73 = por %p71, %p72
      %p74 = scmp.ne.s32.totalorder %s63, %s66
      %p75 = scmp.eq.s32.totalorder %s20, 1
      %p76 = por %p74, %p75
      %p77 = scmp.ne.s32.totalorder %s66, %s67
      %p78 = scmp.eq.s32.totalorder %s20, 0
      %p79 = por %p77, %p78
      %p80 = scmp.ne.s32.totalorder %s66, %s67
      %p81 = scmp.eq.s32.totalorder %s21, 1
      %p82 = por %p80, %p81
      %p84 = scmp.ne.s32.totalorder %s67, %s83
      %p85 = scmp.eq.s32.totalorder %s21, 0
      %p86 = por %p84, %p85
      %s87 = ssub.s32 %s22, %s34
      %s88 = ssub.s32 %s23, %s30
      %s89 = sor.u32 %s87, %s88
      %p90 = scmp.eq.s32.totalorder %s89, 0
      %s92 = sadd.s32 %s91, 1
      %s93 = scalar_select %p90, %s91, %s92
      %p96 = pneg %p90
      %p97 = scmp.eq.s32.totalorder %s15, 1
      %p98 = por %p96, %p97
      %p99 = scmp.ne.s32.totalorder %s91, %s94
      %p100 = scmp.eq.s32.totalorder %s15, 0
      %p101 = por %p99, %p100
      %p102 = scmp.ne.s32.totalorder %s91, %s94
      %p103 = scmp.eq.s32.totalorder %s20, 1
      %p104 = por %p102, %p103
      %p105 = scmp.ne.s32.totalorder %s94, %s95
      %p106 = scmp.eq.s32.totalorder %s20, 0
      %p107 = por %p105, %p106
      %p108 = scmp.ne.s32.totalorder %s94, %s95
      %p109 = scmp.eq.s32.totalorder %s21, 1
      %p110 = por %p108, %p109
      %p112 = scmp.ne.s32.totalorder %s95, %s111
      %p113 = scmp.eq.s32.totalorder %s21, 0
      %p114 = por %p112, %p113
      %p115 = scmp.le.s32.totalorder 1, %s15
      %p116 = scmp.lt.s32.totalorder %s15, 3
      %p117 = pnand %p115, %p116
      %p118 = pneg %p117
      // Predicated region
      $region9: #{tpu_custom_call.1} parent=5 // pred_check
        _
      $region10: #{tpu_custom_call.1} parent=5 // pred_check_branch
        %120 = sbr.rel (%p117) target = $region12
      $region11: #{tpu_custom_call.1} parent=5 // pred_region
        %s121 = ssub.s32 %s15, 1
        // Predicated region
        $region13: #{tpu_custom_call.1} parent=11 // pred_check
          %p122 = pneg %p53
        $region14: #{tpu_custom_call.1} parent=11 // pred_check_branch
          %124 = sbr.rel (%p122) target = $region16
        $region15: #{tpu_custom_call.1} parent=11 // pred_region
          %s125 = smul.u32 2, %s24
          %s127 = ssub.s32 256, 256
          %128 = vsyncadd [#allocation3], %s127
          %s129 = smul.addr %s125, 128
          %s130 = scalar_lea.hbm %s0, %s129
          %s131 = sshll.u32 [#allocation2], 4
          %s132 = int_to_ptr.vmem [resolvable:$true] %s131
          %137 = dma.hbm_to_vmem [thread:$0]  %s130, 256, %s132, [#allocation3], 128, 128, 8
        $region16: #{tpu_custom_call.1} parent=11 // pred_fallthru
          _
      $region12: #{tpu_custom_call.1} parent=5 // pred_fallthru
        _
      %p138 = scmp.lt.s32.totalorder %s15, 2
      // Predicated region
      $region17: #{tpu_custom_call.1} parent=5 // pred_check
        %p139 = pneg %p138
      $region18: #{tpu_custom_call.1} parent=5 // pred_check_branch
        %141 = sbr.rel (%p139) target = $region20
      $region19: #{tpu_custom_call.1} parent=5 // pred_region
        // Predicated region
        $region21: #{tpu_custom_call.1} parent=19 // pred_check
          %p142 = pneg %p73
        $region22: #{tpu_custom_call.1} parent=19 // pred_check_branch
          %144 = sbr.rel (%p142) target = $region24
        $region23: #{tpu_custom_call.1} parent=19 // pred_region
          %s145 = sand.u32 %s63, 1
          %s146 = scalar_lea.sflag [#allocation6], %s145
          %s147 = sand.u32 %s63, 1
          %s148 = smul.addr %s147, 128
          %s149 = scalar_lea.vmem [#allocation5], %s148
          %s150 = smul.u32 16, %s23
          %s152 = ssub.s32 2048, 2048
          %153 = vsyncadd %s146, %s152
          %s154 = smul.addr %s150, 128
          %s155 = scalar_lea.hbm %s1, %s154
          %s156 = sshll.u32 %s149, 4
          %s157 = int_to_ptr.vmem [resolvable:$true] %s156
          %162 = dma.hbm_to_vmem [thread:$0]  %s155, 2048, %s157, %s146, 128, 128, 8
        $region24: #{tpu_custom_call.1} parent=19 // pred_fallthru
          _
      $region20: #{tpu_custom_call.1} parent=5 // pred_fallthru
        _
      %p163 = scmp.le.s32.totalorder 1, %s15
      %p164 = scmp.lt.s32.totalorder %s15, 3
      %p165 = pnand %p163, %p164
      %p166 = pneg %p165
      // Predicated region
      $region25: #{tpu_custom_call.1} parent=5 // pred_check
        _
      $region26: #{tpu_custom_call.1} parent=5 // pred_check_branch
        %168 = sbr.rel (%p165) target = $region28
      $region27: #{tpu_custom_call.1} parent=5 // pred_region
        %s169 = ssub.s32 %s15, 1
        // Predicated region
        $region29: #{tpu_custom_call.1} parent=27 // pred_check
          %p170 = pneg %p53
        $region30: #{tpu_custom_call.1} parent=27 // pred_check_branch
          %172 = sbr.rel (%p170) target = $region32
        $region31: #{tpu_custom_call.1} parent=27 // pred_region
          %173 = dma.done [#allocation3], 256
        $region32: #{tpu_custom_call.1} parent=27 // pred_fallthru
          _
        %s174 = sand.u32 %s66, 1
        %s175 = scalar_lea.sflag [#allocation6], %s174
        %s176 = sand.u32 %s66, 1
        %s177 = smul.addr %s176, 128
        %s178 = scalar_lea.vmem [#allocation5], %s177
        // Predicated region
        $region33: #{tpu_custom_call.1} parent=27 // pred_check
          %p179 = pneg %p79
        $region34: #{tpu_custom_call.1} parent=27 // pred_check_branch
          %181 = sbr.rel (%p179) target = $region36
        $region35: #{tpu_custom_call.1} parent=27 // pred_region
          %182 = dma.done %s175, 2048
        $region36: #{tpu_custom_call.1} parent=27 // pred_fallthru
          _
        %p183 = pneg %p53
        %p184 = pneg %p50
        %s185 = sand.u32 %s66, 1
        %s186 = scalar_lea.sflag [#allocation6], %s185
        %s187 = sand.u32 %s66, 1
        %s188 = smul.addr %s187, 128
        %s189 = scalar_lea.vmem [#allocation5], %s188
        %p190 = pneg %p79
        %p191 = pneg %p76
        %p192 = pneg %p107
        %p193 = pneg %p104
        %s194 = sand.u32 %s94, 1
        %s195 = scalar_lea.sflag [#allocation4], %s194
        %s196 = sand.u32 %s94, 1
        %s197 = smul.addr %s196, 16
        %s198 = scalar_lea.vmem [#allocation7], %s197
        %s199 = smul.u32 2, %s24
        %s200 = smul.u32 16, %s25
        %s201 = smul.u32 2, %s24
        %v202 = vld [vmem:[#allocation2] sm:$0xff]
        %v203 = vld [vmem:[#allocation2 + $0x8] sm:$0xff]
        %v204 = vld [vmem:[%s178] sm:$0xff]
        %v205 = vld [vmem:[%s178 + $0x8] sm:$0xff]
        %v206 = vld [vmem:[%s178 + $0x10] sm:$0xff]
        %v207 = vld [vmem:[%s178 + $0x18] sm:$0xff]
        %v208 = vld [vmem:[%s178 + $0x20] sm:$0xff]
        %v209 = vld [vmem:[%s178 + $0x28] sm:$0xff]
        %v210 = vld [vmem:[%s178 + $0x30] sm:$0xff]
        %v211 = vld [vmem:[%s178 + $0x38] sm:$0xff]
        %v212 = vld [vmem:[%s178 + $0x40] sm:$0xff]
        %v213 = vld [vmem:[%s178 + $0x48] sm:$0xff]
        %v214 = vld [vmem:[%s178 + $0x50] sm:$0xff]
        %v215 = vld [vmem:[%s178 + $0x58] sm:$0xff]
        %v216 = vld [vmem:[%s178 + $0x60] sm:$0xff]
        %v217 = vld [vmem:[%s178 + $0x68] sm:$0xff]
        %v218 = vld [vmem:[%s178 + $0x70] sm:$0xff]
        %v219 = vld [vmem:[%s178 + $0x78] sm:$0xff]
        %v220 = vmul.f32 %v202, %v202
        %v221 = vmul.f32 %v203, %v203
        %222 = vadd.xlane.f32.xlu0 %v220
        %v223 = vpop.xlane.xlu0 %222
        %224 = vadd.xlane.f32.xlu0 %v221
        %v225 = vpop.xlane.xlu0 %224
        %v226 = vrsqrt.pop %v223
        %v227 = vmul.f32 %v223, %v226
        %vm228 = vcmp.eq.f32.partialorder %v223, inf
        %v229 = vsel %vm228, %v223, %v227
        %vm230 = vcmp.eq.f32.partialorder %v223, 0.0
        %v231 = vand.u32 %v223, 2147483648
        %v232 = vsel %vm230, %v231, %v229
        %v233 = vrsqrt.pop %v225
        %v234 = vmul.f32 %v225, %v233
        %vm235 = vcmp.eq.f32.partialorder %v225, inf
        %v236 = vsel %vm235, %v225, %v234
        %vm237 = vcmp.eq.f32.partialorder %v225, 0.0
        %v238 = vand.u32 %v225, 2147483648
        %v239 = vsel %vm237, %v238, %v236
        %v240 = vmul.f32 %v204, %v204
        %v241 = vmul.f32 %v205, %v205
        %v242 = vmul.f32 %v206, %v206
        %v243 = vmul.f32 %v207, %v207
        %v244 = vmul.f32 %v208, %v208
        %v245 = vmul.f32 %v209, %v209
        %v246 = vmul.f32 %v210, %v210
        %v247 = vmul.f32 %v211, %v211
        %v248 = vmul.f32 %v212, %v212
        %v249 = vmul.f32 %v213, %v213
        %v250 = vmul.f32 %v214, %v214
        %v251 = vmul.f32 %v215, %v215
        %v252 = vmul.f32 %v216, %v216
        %v253 = vmul.f32 %v217, %v217
        %v254 = vmul.f32 %v218, %v218
        %v255 = vmul.f32 %v219, %v219
        %256 = vadd.xlane.f32.xlu0 %v240
        %v257 = vpop.xlane.xlu0 %256
        %258 = vadd.xlane.f32.xlu0 %v241
        %v259 = vpop.xlane.xlu0 %258
        %260 = vadd.xlane.f32.xlu0 %v242
        %v261 = vpop.xlane.xlu0 %260
        %262 = vadd.xlane.f32.xlu0 %v243
        %v263 = vpop.xlane.xlu0 %262
        %264 = vadd.xlane.f32.xlu0 %v244
        %v265 = vpop.xlane.xlu0 %264
        %266 = vadd.xlane.f32.xlu0 %v245
        %v267 = vpop.xlane.xlu0 %266
        %268 = vadd.xlane.f32.xlu0 %v246
        %v269 = vpop.xlane.xlu0 %268
        %270 = vadd.xlane.f32.xlu0 %v247
        %v271 = vpop.xlane.xlu0 %270
        %272 = vadd.xlane.f32.xlu0 %v248
        %v273 = vpop.xlane.xlu0 %272
        %274 = vadd.xlane.f32.xlu0 %v249
        %v275 = vpop.xlane.xlu0 %274
        %276 = vadd.xlane.f32.xlu0 %v250
        %v277 = vpop.xlane.xlu0 %276
        %278 = vadd.xlane.f32.xlu0 %v251
        %v279 = vpop.xlane.xlu0 %278
        %280 = vadd.xlane.f32.xlu0 %v252
        %v281 = vpop.xlane.xlu0 %280
        %282 = vadd.xlane.f32.xlu0 %v253
        %v283 = vpop.xlane.xlu0 %282
        %284 = vadd.xlane.f32.xlu0 %v254
        %v285 = vpop.xlane.xlu0 %284
        %286 = vadd.xlane.f32.xlu0 %v255
        %v287 = vpop.xlane.xlu0 %286
        %v288 = vrsqrt.pop %v257
        %v289 = vmul.f32 %v257, %v288
        %vm290 = vcmp.eq.f32.partialorder %v257, inf
        %v291 = vsel %vm290, %v257, %v289
        %vm292 = vcmp.eq.f32.partialorder %v257, 0.0
        %v293 = vand.u32 %v257, 2147483648
        %v294 = vsel %vm292, %v293, %v291
        %v295 = vrsqrt.pop %v259
        %v296 = vmul.f32 %v259, %v295
        %vm297 = vcmp.eq.f32.partialorder %v259, inf
        %v298 = vsel %vm297, %v259, %v296
        %vm299 = vcmp.eq.f32.partialorder %v259, 0.0
        %v300 = vand.u32 %v259, 2147483648
        %v301 = vsel %vm299, %v300, %v298
        %v302 = vrsqrt.pop %v261
        %v303 = vmul.f32 %v261, %v302
        %vm304 = vcmp.eq.f32.partialorder %v261, inf
        %v305 = vsel %vm304, %v261, %v303
        %vm306 = vcmp.eq.f32.partialorder %v261, 0.0
        %v307 = vand.u32 %v261, 2147483648
        %v308 = vsel %vm306, %v307, %v305
        %v309 = vrsqrt.pop %v263
        %v310 = vmul.f32 %v263, %v309
        %vm311 = vcmp.eq.f32.partialorder %v263, inf
        %v312 = vsel %vm311, %v263, %v310
        %vm313 = vcmp.eq.f32.partialorder %v263, 0.0
        %v314 = vand.u32 %v263, 2147483648
        %v315 = vsel %vm313, %v314, %v312
        %v316 = vrsqrt.pop %v265
        %v317 = vmul.f32 %v265, %v316
        %vm318 = vcmp.eq.f32.partialorder %v265, inf
        %v319 = vsel %vm318, %v265, %v317
        %vm320 = vcmp.eq.f32.partialorder %v265, 0.0
        %v321 = vand.u32 %v265, 2147483648
        %v322 = vsel %vm320, %v321, %v319
        %v323 = vrsqrt.pop %v267
        %v324 = vmul.f32 %v267, %v323
        %vm325 = vcmp.eq.f32.partialorder %v267, inf
        %v326 = vsel %vm325, %v267, %v324
        %vm327 = vcmp.eq.f32.partialorder %v267, 0.0
        %v328 = vand.u32 %v267, 2147483648
        %v329 = vsel %vm327, %v328, %v326
        %v330 = vrsqrt.pop %v269
        %v331 = vmul.f32 %v269, %v330
        %vm332 = vcmp.eq.f32.partialorder %v269, inf
        %v333 = vsel %vm332, %v269, %v331
        %vm334 = vcmp.eq.f32.partialorder %v269, 0.0
        %v335 = vand.u32 %v269, 2147483648
        %v336 = vsel %vm334, %v335, %v333
        %v337 = vrsqrt.pop %v271
        %v338 = vmul.f32 %v271, %v337
        %vm339 = vcmp.eq.f32.partialorder %v271, inf
        %v340 = vsel %vm339, %v271, %v338
        %vm341 = vcmp.eq.f32.partialorder %v271, 0.0
        %v342 = vand.u32 %v271, 2147483648
        %v343 = vsel %vm341, %v342, %v340
        %v344 = vrsqrt.pop %v273
        %v345 = vmul.f32 %v273, %v344
        %vm346 = vcmp.eq.f32.partialorder %v273, inf
        %v347 = vsel %vm346, %v273, %v345
        %vm348 = vcmp.eq.f32.partialorder %v273, 0.0
        %v349 = vand.u32 %v273, 2147483648
        %v350 = vsel %vm348, %v349, %v347
        %v351 = vrsqrt.pop %v275
        %v352 = vmul.f32 %v275, %v351
        %vm353 = vcmp.eq.f32.partialorder %v275, inf
        %v354 = vsel %vm353, %v275, %v352
        %vm355 = vcmp.eq.f32.partialorder %v275, 0.0
        %v356 = vand.u32 %v275, 2147483648
        %v357 = vsel %vm355, %v356, %v354
        %v358 = vrsqrt.pop %v277
        %v359 = vmul.f32 %v277, %v358
        %vm360 = vcmp.eq.f32.partialorder %v277, inf
        %v361 = vsel %vm360, %v277, %v359
        %vm362 = vcmp.eq.f32.partialorder %v277, 0.0
        %v363 = vand.u32 %v277, 2147483648
        %v364 = vsel %vm362, %v363, %v361
        %v365 = vrsqrt.pop %v279
        %v366 = vmul.f32 %v279, %v365
        %vm367 = vcmp.eq.f32.partialorder %v279, inf
        %v368 = vsel %vm367, %v279, %v366
        %vm369 = vcmp.eq.f32.partialorder %v279, 0.0
        %v370 = vand.u32 %v279, 2147483648
        %v371 = vsel %vm369, %v370, %v368
        %v372 = vrsqrt.pop %v281
        %v373 = vmul.f32 %v281, %v372
        %vm374 = vcmp.eq.f32.partialorder %v281, inf
        %v375 = vsel %vm374, %v281, %v373
        %vm376 = vcmp.eq.f32.partialorder %v281, 0.0
        %v377 = vand.u32 %v281, 2147483648
        %v378 = vsel %vm376, %v377, %v375
        %v379 = vrsqrt.pop %v283
        %v380 = vmul.f32 %v283, %v379
        %vm381 = vcmp.eq.f32.partialorder %v283, inf
        %v382 = vsel %vm381, %v283, %v380
        %vm383 = vcmp.eq.f32.partialorder %v283, 0.0
        %v384 = vand.u32 %v283, 2147483648
        %v385 = vsel %vm383, %v384, %v382
        %v386 = vrsqrt.pop %v285
        %v387 = vmul.f32 %v285, %v386
        %vm388 = vcmp.eq.f32.partialorder %v285, inf
        %v389 = vsel %vm388, %v285, %v387
        %vm390 = vcmp.eq.f32.partialorder %v285, 0.0
        %v391 = vand.u32 %v285, 2147483648
        %v392 = vsel %vm390, %v391, %v389
        %v393 = vrsqrt.pop %v287
        %v394 = vmul.f32 %v287, %v393
        %vm395 = vcmp.eq.f32.partialorder %v287, inf
        %v396 = vsel %vm395, %v287, %v394
        %vm397 = vcmp.eq.f32.partialorder %v287, 0.0
        %v398 = vand.u32 %v287, 2147483648
        %v399 = vsel %vm397, %v398, %v396
        %v400 = vadd.f32 %v232, 1e-05
        %v401 = vadd.f32 %v239, 1e-05
        %v402 = vrcp.pop %v400
        %v403 = vmul.f32 1.0, %v402
        %v404 = vrcp.pop %v401
        %v405 = vmul.f32 1.0, %v404
        %v406 = vmul.f32 %v202, %v403
        %v407 = vmul.f32 %v203, %v405
        %v408 = vadd.f32 %v294, 1e-05
        %v409 = vadd.f32 %v301, 1e-05
        %v410 = vadd.f32 %v308, 1e-05
        %v411 = vadd.f32 %v315, 1e-05
        %v412 = vadd.f32 %v322, 1e-05
        %v413 = vadd.f32 %v329, 1e-05
        %v414 = vadd.f32 %v336, 1e-05
        %v415 = vadd.f32 %v343, 1e-05
        %v416 = vadd.f32 %v350, 1e-05
        %v417 = vadd.f32 %v357, 1e-05
        %v418 = vadd.f32 %v364, 1e-05
        %v419 = vadd.f32 %v371, 1e-05
        %v420 = vadd.f32 %v378, 1e-05
        %v421 = vadd.f32 %v385, 1e-05
        %v422 = vadd.f32 %v392, 1e-05
        %v423 = vadd.f32 %v399, 1e-05
        %v424 = vrcp.pop %v408
        %v425 = vmul.f32 1.0, %v424
        %v426 = vrcp.pop %v409
        %v427 = vmul.f32 1.0, %v426
        %v428 = vrcp.pop %v410
        %v429 = vmul.f32 1.0, %v428
        %v430 = vrcp.pop %v411
        %v431 = vmul.f32 1.0, %v430
        %v432 = vrcp.pop %v412
        %v433 = vmul.f32 1.0, %v432
        %v434 = vrcp.pop %v413
        %v435 = vmul.f32 1.0, %v434
        %v436 = vrcp.pop %v414
        %v437 = vmul.f32 1.0, %v436
        %v438 = vrcp.pop %v415
        %v439 = vmul.f32 1.0, %v438
        %v440 = vrcp.pop %v416
        %v441 = vmul.f32 1.0, %v440
        %v442 = vrcp.pop %v417
        %v443 = vmul.f32 1.0, %v442
        %v444 = vrcp.pop %v418
        %v445 = vmul.f32 1.0, %v444
        %v446 = vrcp.pop %v419
        %v447 = vmul.f32 1.0, %v446
        %v448 = vrcp.pop %v420
        %v449 = vmul.f32 1.0, %v448
        %v450 = vrcp.pop %v421
        %v451 = vmul.f32 1.0, %v450
        %v452 = vrcp.pop %v422
        %v453 = vmul.f32 1.0, %v452
        %v454 = vrcp.pop %v423
        %v455 = vmul.f32 1.0, %v454
        %v456 = vmul.f32 %v204, %v425
        %v457 = vmul.f32 %v205, %v427
        %v458 = vmul.f32 %v206, %v429
        %v459 = vmul.f32 %v207, %v431
        %v460 = vmul.f32 %v208, %v433
        %v461 = vmul.f32 %v209, %v435
        %v462 = vmul.f32 %v210, %v437
        %v463 = vmul.f32 %v211, %v439
        %v464 = vmul.f32 %v212, %v441
        %v465 = vmul.f32 %v213, %v443
        %v466 = vmul.f32 %v214, %v445
        %v467 = vmul.f32 %v215, %v447
        %v468 = vmul.f32 %v216, %v449
        %v469 = vmul.f32 %v217, %v451
        %v470 = vmul.f32 %v218, %v453
        %v471 = vmul.f32 %v219, %v455
        %472 = vmatprep.subr.mxu0 0.0
        %473 = vmatpush1.xpose.msra.mxu0 %v456
        %474 = vmatprep.subr.mxu0 0.0
        %475 = vmatpush1.xpose.msra.mxu0 %v457
        %476 = vmatprep.subr.mxu0 0.0
        %477 = vmatpush1.xpose.msra.mxu0 %v458
        %478 = vmatprep.subr.mxu0 0.0
        %479 = vmatpush1.xpose.msra.mxu0 %v459
        %480 = vmatprep.subr.mxu0 0.0
        %481 = vmatpush1.xpose.msra.mxu0 %v460
        %482 = vmatprep.subr.mxu0 0.0
        %483 = vmatpush1.xpose.msra.mxu0 %v461
        %484 = vmatprep.subr.mxu0 0.0
        %485 = vmatpush1.xpose.msra.mxu0 %v462
        %486 = vmatprep.subr.mxu0 0.0
        %487 = vmatpush1.xpose.msra.mxu0 %v463
        %488 = vmatprep.subr.mxu0 0.0
        %489 = vmatpush1.xpose.msra.mxu0 %v464
        %490 = vmatprep.subr.mxu0 0.0
        %491 = vmatpush1.xpose.msra.mxu0 %v465
        %492 = vmatprep.subr.mxu0 0.0
        %493 = vmatpush1.xpose.msra.mxu0 %v466
        %494 = vmatprep.subr.mxu0 0.0
        %495 = vmatpush1.xpose.msra.mxu0 %v467
        %496 = vmatprep.subr.mxu0 0.0
        %497 = vmatpush1.xpose.msra.mxu0 %v468
        %498 = vmatprep.subr.mxu0 0.0
        %499 = vmatpush1.xpose.msra.mxu0 %v469
        %500 = vmatprep.subr.mxu0 0.0
        %501 = vmatpush1.xpose.msra.mxu0 %v470
        %502 = vmatprep.subr.mxu0 0.0
        %503 = vmatpush1.xpose.msra.mxu0 %v471
        %504 = vmatprep.subr.mxu0 0.0
        %505 = vmatpush1.xpose.msra.mxu0 0.0
        %506 = vmatprep.subr.mxu0 0.0
        %507 = vmatpush1.xpose.msra.mxu0 0.0
        %508 = vmatprep.subr.mxu0 0.0
        %509 = vmatpush1.xpose.msra.mxu0 0.0
        %510 = vmatprep.subr.mxu0 0.0
        %511 = vmatpush1.xpose.msra.mxu0 0.0
        %512 = vmatprep.subr.mxu0 0.0
        %513 = vmatpush1.xpose.msra.mxu0 0.0
        %514 = vmatprep.subr.mxu0 0.0
        %515 = vmatpush1.xpose.msra.mxu0 0.0
        %516 = vmatprep.subr.mxu0 0.0
        %517 = vmatpush1.xpose.msra.mxu0 0.0
        %518 = vmatprep.subr.mxu0 0.0
        %519 = vmatpush1.xpose.msra.mxu0 0.0
        %520 = vmatprep.subr.mxu0 0.0
        %521 = vmatpush1.xpose.msra.mxu0 0.0
        %522 = vmatprep.subr.mxu0 0.0
        %523 = vmatpush1.xpose.msra.mxu0 0.0
        %524 = vmatprep.subr.mxu0 0.0
        %525 = vmatpush1.xpose.msra.mxu0 0.0
        %526 = vmatprep.subr.mxu0 0.0
        %527 = vmatpush1.xpose.msra.mxu0 0.0
        %528 = vmatprep.subr.mxu0 0.0
        %529 = vmatpush1.xpose.msra.mxu0 0.0
        %530 = vmatprep.subr.mxu0 0.0
        %531 = vmatpush1.xpose.msra.mxu0 0.0
        %532 = vmatprep.subr.mxu0 0.0
        %533 = vmatpush1.xpose.msra.mxu0 0.0
        %534 = vmatprep.subr.mxu0 0.0
        %535 = vmatpush1.xpose.msra.mxu0 0.0
        %536 = vmatprep.mubr.f32.mxu0 0.0
        %537 = vmatmul.mubr.f32.gmra.mrb[0].mxu0 %v406
        %v538 = vpop.f32.mrb[0].mxu0
        %v539 = vadd.f32 0.0, %v538
        %v540 = vpop.f32.mrb[0].mxu0
        %541 = vmatprep.mubr.f32.mxu0 0.0
        %542 = vmatmul.mubr.f32.gmra.mrb[0].mxu0 %v407
        %v543 = vpop.f32.mrb[0].mxu0
        %v544 = vadd.f32 0.0, %v543
        %v545 = vpop.f32.mrb[0].mxu0
        %546 = vdwg.mxu0
        %v547 = vmul.f32 %v539, 10.0
        %v548 = vmul.f32 %v544, 10.0
        %549 = vst [vmem:[%s198] sm:$0xff] %v547
        %550 = vst [vmem:[%s198 + $0x8] sm:$0xff] %v548
        %s551 = sand.u32 %s94, 1
        %s552 = scalar_lea.sflag [#allocation4], %s551
        %s553 = sand.u32 %s94, 1
        %s554 = smul.addr %s553, 16
        %s555 = scalar_lea.vmem [#allocation7], %s554
        // Predicated region
        $region37: #{tpu_custom_call.1} parent=27 // pred_check
          %p556 = pneg %p104
        $region38: #{tpu_custom_call.1} parent=27 // pred_check_branch
          %558 = sbr.rel (%p556) target = $region40
        $region39: #{tpu_custom_call.1} parent=27 // pred_region
          %s559 = smul.u32 2, %s24
          %s561 = ssub.s32 256, 256
          %562 = vsyncadd %s552, %s561
          %s563 = smul.addr %s559, 2
          %s564 = sadd.s32 %s25, %s563
          %s565 = smul.addr %s564, 128
          %s566 = scalar_lea.hbm %s2, %s565
          %s567 = sshll.u32 %s555, 4
          %s568 = int_to_ptr.vmem [resolvable:$true] %s567
          %573 = dma.vmem_to_hbm [thread:$0]  %s568, 256, %s566, %s552, 128, 256, 8
        $region40: #{tpu_custom_call.1} parent=27 // pred_fallthru
          _
      $region28: #{tpu_custom_call.1} parent=5 // pred_fallthru
        _
      %p574 = scmp.le.s32.totalorder 2, %s15
      // Predicated region
      $region41: #{tpu_custom_call.1} parent=5 // pred_check
        %p575 = pneg %p574
      $region42: #{tpu_custom_call.1} parent=5 // pred_check_branch
        %577 = sbr.rel (%p575) target = $region44
      $region43: #{tpu_custom_call.1} parent=5 // pred_region
        %s578 = ssub.s32 %s15, 2
        // Predicated region
        $region45: #{tpu_custom_call.1} parent=43 // pred_check
          %p579 = pneg %p110
        $region46: #{tpu_custom_call.1} parent=43 // pred_check_branch
          %581 = sbr.rel (%p579) target = $region48
        $region47: #{tpu_custom_call.1} parent=43 // pred_region
          %s582 = sand.u32 %s95, 1
          %s583 = scalar_lea.sflag [#allocation4], %s582
          %s584 = sand.u32 %s95, 1
          %s585 = smul.addr %s584, 16
          %s586 = scalar_lea.vmem [#allocation7], %s585
          %587 = dma.done %s583, 256
        $region48: #{tpu_custom_call.1} parent=43 // pred_fallthru
          _
      $region44: #{tpu_custom_call.1} parent=5 // pred_fallthru
        _
    $region6: #{tpu_custom_call.1} parent=1 // loop_footer
      %s19 = sadd.s32 1, %s15
    $region7: #{tpu_custom_call.1} parent=1 // loop_footer_branch
      %14 = sbr.rel target = $region3
    $region8: #{tpu_custom_call.1} parent=1 // loop_exit
      _
    %588 = vsyncpa [#allocation3], 1
    %s589 = scalar_lea.sflag [#allocation3], 1
    %590 = vsyncpa %s589, 1
    %591 = vsyncpa [#allocation6], 1
    %s592 = scalar_lea.sflag [#allocation6], 1
    %593 = vsyncpa %s592, 1
    %594 = vsyncpa [#allocation4], 1
    %s595 = scalar_lea.sflag [#allocation4], 1
    %596 = vsyncpa %s595, 1

</llo_original>
